<compile_context>
chip_gen: v6e
topology: v6e:2x2x1
jax: 0.10.0
libtpu: 0.0.40
codegen_flags: <defaults>
</compile_context>

<pallas_src>
import functools

import jax
import jax.numpy as jnp
from jax.experimental import pallas as pl
from jax.experimental.pallas import tpu as pltpu


def _round_up(x: int, m: int) -> int:
    return ((x + m - 1) // m) * m


def _tpu_params():
    """Best-effort chip query: (VMEM capacity bytes, TensorCores per chip)."""
    cap = 64 * 1024 * 1024  # conservative default (v7x per-TC)
    cores = 1
    try:
        info = pltpu.get_tpu_info()
        cap = int(getattr(info, "vmem_capacity_bytes", cap))
    except Exception:
        pass
    try:
        kind = jax.devices()[0].device_kind.lower()
        if "v7" in kind or "7x" in kind:
            cores = 2  # v7x: 2 TensorCores per chip share the parallel grid axes
    except Exception:
        pass
    return cap, cores


def _choose_tm(m: int, align: int):
    """Pick a row tile: as large as possible while keeping pad waste <=12.5%."""
    m = max(m, align)
    for cand in (512, 256, 128, 64, 32, 16, 8):
        if cand < align:
            continue
        padded = _round_up(m, cand)
        if (padded - m) * 8 <= padded:
            return cand, padded
    return align, _round_up(m, align)


def _fused_vmem_need(layers, tm, x_itemsize, out_itemsize):
    kp0 = layers[0]["w"].shape[0]
    np_last = layers[-1]["w"].shape[1]
    need = 2 * tm * kp0 * x_itemsize + 2 * tm * np_last * out_itemsize
    max_np = 0
    for layer in layers:
        w, b = layer["w"], layer["b"]
        need += 2 * (w.size * w.dtype.itemsize + b.size * b.dtype.itemsize)
        max_np = max(max_np, w.shape[1])
    # in-kernel activations (f32 result + bf16 operand) per live layer, rough.
    need += 2 * 6 * tm * max_np
    return need


# ---------------------------------------------------------------------------
# Kernel A: whole MLP fused in one pallas_call (grid over row tiles only).
# ---------------------------------------------------------------------------
def pallas_fused_mlp(x2d, layers, *, out_dtype, tm, vmem_cap):
    Mp, Kp0 = x2d.shape
    np_last = layers[-1]["w"].shape[1]
    relu_flags = tuple(layer["relu"] for layer in layers)
    n = len(relu_flags)

    def kernel(*refs):
        x_ref, o_ref = refs[0], refs[-1]
        y = x_ref[...]
        for i, relu in enumerate(relu_flags):
            w_ref = refs[1 + 2 * i]
            b_ref = refs[2 + 2 * i]
            z = jnp.dot(y, w_ref[...], preferred_element_type=jnp.float32)
            z = z + b_ref[...].astype(jnp.float32)
            if relu:
                z = jnp.maximum(z, 0.0)
            if i + 1 < n:
                y = z.astype(w_ref.dtype)  # bf16 operand for the next matmul
            else:
                o_ref[...] = z.astype(o_ref.dtype)

    in_specs = [pl.BlockSpec((tm, Kp0), lambda i: (i, 0))]
    args = [x2d]
    for layer in layers:
        kp_i, np_i = layer["w"].shape
        in_specs.append(pl.BlockSpec((kp_i, np_i), lambda i: (0, 0)))
        in_specs.append(pl.BlockSpec((1, np_i), lambda i: (0, 0)))
        args += [layer["w"], layer["b"]]

    need = _fused_vmem_need(layers, tm, x2d.dtype.itemsize,
                            jnp.dtype(out_dtype).itemsize)
    vmem_limit = int(min(vmem_cap * 3 // 4, max(need + (8 << 20), 32 << 20)))

    return pl.pallas_call(
        kernel,
        out_shape=jax.ShapeDtypeStruct((Mp, np_last), out_dtype),
        grid_spec=pltpu.PrefetchScalarGridSpec(
            num_scalar_prefetch=0,
            grid=(Mp // tm,),
            in_specs=in_specs,
            out_specs=pl.BlockSpec((tm, np_last), lambda i: (i, 0)),
        ),
        compiler_params=pltpu.CompilerParams(
            dimension_semantics=("parallel",),
            vmem_limit_bytes=vmem_limit,
        ),
    )(*args)


# ---------------------------------------------------------------------------
# Kernel B: one linear layer, full-K single step (no scratch, no reduction axis)
# ---------------------------------------------------------------------------
def _linear_kernel_single_k(x_ref, w_ref, b_ref, o_ref, *, apply_relu):
    out = jnp.dot(x_ref[...], w_ref[...], preferred_element_type=jnp.float32)
    out = out + b_ref[...].astype(jnp.float32)
    if apply_relu:
        out = jnp.maximum(out, 0.0)
    o_ref[...] = out.astype(o_ref.dtype)


# ---------------------------------------------------------------------------
# Kernel C: one linear layer, K-streamed with f32 accumulator (bias-initialized)
# ---------------------------------------------------------------------------
def _linear_kernel_acc(x_ref, w_ref, b_ref, o_ref, acc_ref, *, apply_relu):
    k = pl.program_id(2)

    @pl.when(k == 0)
    def _():
        acc_ref[...] = jnp.broadcast_to(
            b_ref[...].astype(jnp.float32), acc_ref.shape)

    acc_ref[...] += jnp.dot(
        x_ref[...], w_ref[...], preferred_element_type=jnp.float32)

    @pl.when(k == pl.num_programs(2) - 1)
    def _():
        out = acc_ref[...]
        if apply_relu:
            out = jnp.maximum(out, 0.0)
        o_ref[...] = out.astype(o_ref.dtype)


def pallas_linear_padded(x2d, w, b, *, apply_relu, out_dtype, tm, vmem_cap, cores):
    """y = x2d @ w + b with optional fused ReLU (padded, lane-dense shapes)."""
    Mp, Kp = x2d.shape
    Np = w.shape[1]
    xb = x2d.dtype.itemsize
    wb = w.dtype.itemsize
    ob = jnp.dtype(out_dtype).itemsize

    tn = 256 if Np % 256 == 0 else (128 if Np % 128 == 0 else Np)
    # v7x: make sure a parallel axis has >= 2 blocks so the 2nd TC gets work.
    if cores >= 2 and (Mp // tm) * (Np // tn) < 2 and tn > 128 and Np % 128 == 0:
        tn = 128

    budget = vmem_cap // 2

    def need(tk, with_acc):
        nbytes = (2 * tm * tk * xb + 2 * tk * tn * wb
                  + 2 * tn * 4 + 2 * tm * tn * ob)
        if with_acc:
            nbytes += tm * tn * 4
        return nbytes

    tk = None
    for cand in (Kp, 2048, 1024, 512, 256, 128):
        if cand <= Kp and Kp % cand == 0 and need(cand, cand != Kp) <= budget:
            tk = cand
            break
    if tk is None:
        tk = 128

    vmem_limit = int(min(vmem_cap * 3 // 4,
                         max(need(tk, tk != Kp) + (8 << 20), 32 << 20)))

    if tk == Kp:
        # Collapsed reduction: one MXU pass per (i, j), no accumulator scratch.
        kernel = functools.partial(_linear_kernel_single_k, apply_relu=apply_relu)
        return pl.pallas_call(
            kernel,
            out_shape=jax.ShapeDtypeStruct((Mp, Np), out_dtype),
            grid_spec=pltpu.PrefetchScalarGridSpec(
                num_scalar_prefetch=0,
                grid=(Mp // tm, Np // tn),
                in_specs=[
                    pl.BlockSpec((tm, Kp), lambda i, j: (i, 0)),
                    pl.BlockSpec((Kp, tn), lambda i, j: (0, j)),
                    pl.BlockSpec((1, tn), lambda i, j: (0, j)),
                ],
                out_specs=pl.BlockSpec((tm, tn), lambda i, j: (i, j)),
            ),
            compiler_params=pltpu.CompilerParams(
                dimension_semantics=("parallel", "parallel"),
                vmem_limit_bytes=vmem_limit,
            ),
        )(x2d, w, b)

    # K-streamed fallback for very large layers.
    # TODO(synk): sweep pipeline_mode=pl.Buffered(3) on the weight spec for v5e.
    kernel = functools.partial(_linear_kernel_acc, apply_relu=apply_relu)
    return pl.pallas_call(
        kernel,
        out_shape=jax.ShapeDtypeStruct((Mp, Np), out_dtype),
        grid_spec=pltpu.PrefetchScalarGridSpec(
            num_scalar_prefetch=0,
            grid=(Mp // tm, Np // tn, Kp // tk),
            in_specs=[
                pl.BlockSpec((tm, tk), lambda i, j, k: (i, k)),
                pl.BlockSpec((tk, tn), lambda i, j, k: (k, j)),
                pl.BlockSpec((1, tn), lambda i, j, k: (0, j)),
            ],
            out_specs=pl.BlockSpec((tm, tn), lambda i, j, k: (i, j)),
            scratch_shapes=[pltpu.VMEM((tm, tn), jnp.float32)],
        ),
        compiler_params=pltpu.CompilerParams(
            dimension_semantics=("parallel", "parallel", "arbitrary"),
            vmem_limit_bytes=vmem_limit,
        ),
    )(x2d, w, b)


# ---------------------------------------------------------------------------
# Module: mirrors torch FullyConnected (Linear/ReLU stack behind a dict API).
# ---------------------------------------------------------------------------
class FullyConnectedPallas:
    def __init__(self, in_features, out_features, hidden_features, n_layers,
                 activation="ReLu", bias=True,
                 input_name="context", output_name="prediction",
                 compute_dtype=jnp.bfloat16, key=None):
        # Note: like the reference torch module, the activation is hard-wired
        # to ReLU regardless of the `activation` string.
        del activation

        self.input_name = input_name
        self.output_name = output_name
        self.in_features = in_features
        self.out_features = out_features
        self.compute_dtype = compute_dtype
        self._vmem_cap, self._cores = _tpu_params()

        if key is None:
            key = jax.random.PRNGKey(0)

        # Same layer structure as the torch module.
        dims = [(in_features, hidden_features, True)]
        for _ in range(n_layers - 2):
            dims.append((hidden_features, hidden_features, True))
        dims.append((hidden_features, out_features, False))

        keys = jax.random.split(key, len(dims))
        self.layers = [
            self._make_layer(k, fi, fo, bias, relu)
            for k, (fi, fo, relu) in zip(keys, dims)
        ]

    def _make_layer(self, key, fan_in, fan_out, use_bias, relu):
        kw, kb = jax.random.split(key)
        bound = 1.0 / (fan_in ** 0.5)  # nn.Linear default init
        w = jax.random.uniform(kw, (fan_out, fan_in), jnp.float32, -bound, bound)
        if use_bias:
            b = jax.random.uniform(kb, (fan_out,), jnp.float32, -bound, bound)
        else:
            b = jnp.zeros((fan_out,), jnp.float32)

        # Pad features to multiples of 128 once, store transposed + bf16 weight.
        kp = _round_up(fan_in, 128)
        np_ = _round_up(fan_out, 128)
        w_pad = jnp.zeros((kp, np_), jnp.float32).at[:fan_in, :fan_out].set(w.T)
        b_pad = jnp.zeros((1, np_), jnp.float32).at[0, :fan_out].set(b)
        return {"w": w_pad.astype(self.compute_dtype), "b": b_pad, "relu": relu}

    # ---- forward -----------------------------------------------------------
    def _forward(self, x):
        in_dtype = x.dtype
        lead = x.shape[:-1]
        x2d = x.reshape(-1, x.shape[-1])
        M, K = x2d.shape

        kp0 = self.layers[0]["w"].shape[0]
        align = 16 if jnp.dtype(self.compute_dtype).itemsize == 2 else 8
        tm, mp = _choose_tm(M, align)
        # v7x: split the (parallel) row axis so both TensorCores get a block.
        if self._cores >= 2 and mp // tm == 1 and tm >= 2 * align:
            tm //= 2

        # Single host-side pad for the whole MLP.
        y = jnp.pad(x2d, ((0, mp - M), (0, kp0 - K))).astype(self.compute_dtype)

        need = _fused_vmem_need(self.layers, tm,
                                jnp.dtype(self.compute_dtype).itemsize,
                                jnp.dtype(in_dtype).itemsize)
        if need <= self._vmem_cap // 2:
            # Whole MLP in one kernel: intermediates never leave VMEM.
            y = pallas_fused_mlp(y, self.layers, out_dtype=in_dtype,
                                 tm=tm, vmem_cap=self._vmem_cap)
        else:
            n = len(self.layers)
            for idx, layer in enumerate(self.layers):
                last = idx == n - 1
                y = pallas_linear_padded(
                    y, layer["w"], layer["b"],
                    apply_relu=layer["relu"],
                    out_dtype=(in_dtype if last else self.compute_dtype),
                    tm=tm, vmem_cap=self._vmem_cap, cores=self._cores)

        out = y[:M, :self.out_features]
        return out.reshape(*lead, self.out_features)

    def __call__(self, batch: dict) -> dict:
        batch[self.output_name] = self._forward(batch[self.input_name])
        return batch


# ---------------------------------------------------------------------------
# Pure-JAX reference mirroring the kernel dataflow (bf16 operands, f32 accum).
# ---------------------------------------------------------------------------
def _reference_forward(module, x):
    lead = x.shape[:-1]
    y = x.reshape(-1, x.shape[-1]).astype(jnp.float32)
    kp = module.layers[0]["w"].shape[0]
    y = jnp.pad(y, ((0, 0), (0, kp - y.shape[1])))
    for layer in module.layers:
        yq = y.astype(module.compute_dtype).astype(jnp.float32)
        w = layer["w"].astype(jnp.float32)
        z = yq @ w + layer["b"]
        if layer["relu"]:
            z = jnp.maximum(z, 0.0)
        y = z
    out = y[:, :module.out_features]
    return out.reshape(*lead, module.out_features).astype(x.dtype)


if __name__ == "__main__":
    key = jax.random.PRNGKey(0)
    kx, kmod = jax.random.split(key)

    batch, seq = 2, 8
    in_features, hidden_features, out_features, n_layers = 32, 64, 16, 3

    x = jax.random.normal(kx, (batch, seq, in_features), jnp.float32)

    module = FullyConnectedPallas(
        in_features, out_features, hidden_features, n_layers,
        activation="ReLu", bias=True,
        input_name="context", output_name="prediction", key=kmod)

    batch_dict = {"context": x}
    out_dict = module(batch_dict)
    pred = jax.block_until_ready(out_dict["prediction"])

    assert pred.shape == (batch, seq, out_features)
    assert pred.dtype == x.dtype

    ref = _reference_forward(module, x)
    max_err = float(jnp.max(jnp.abs(pred - ref)))
    assert jnp.allclose(pred, ref, atol=1e-3, rtol=1e-3), max_err

    print("KERNEL_OK")
</pallas_src>

<mosaic_0001>
module attributes {stable_mosaic.version = 11 : i64} {
  func.func @kernel(%arg0: i32, %arg1: memref<16x128xbf16, #tpu.memory_space<vmem>>, %arg2: memref<128x128xbf16, #tpu.memory_space<vmem>>, %arg3: memref<1x128xf32, #tpu.memory_space<vmem>>, %arg4: memref<128x128xbf16, #tpu.memory_space<vmem>>, %arg5: memref<1x128xf32, #tpu.memory_space<vmem>>, %arg6: memref<128x128xbf16, #tpu.memory_space<vmem>>, %arg7: memref<1x128xf32, #tpu.memory_space<vmem>>, %arg8: memref<16x128xf32, #tpu.memory_space<vmem>>) attributes {dimension_semantics = [#tpu.dimension_semantics<parallel>], iteration_bounds = array<i64: 1>, scalar_prefetch = 0 : i64, scratch_operands = 0 : i64, tpu.core_type = #tpu.core_type<tc>, window_params = [{transform_indices = @transform_0, window_bounds = array<i64: 16, 128>}, {pipeline_mode = #tpu.pipeline_mode<synchronous>, transform_indices = @transform_1, window_bounds = array<i64: 128, 128>}, {pipeline_mode = #tpu.pipeline_mode<synchronous>, transform_indices = @transform_2, window_bounds = array<i64: 1, 128>}, {pipeline_mode = #tpu.pipeline_mode<synchronous>, transform_indices = @transform_3, window_bounds = array<i64: 128, 128>}, {pipeline_mode = #tpu.pipeline_mode<synchronous>, transform_indices = @transform_4, window_bounds = array<i64: 1, 128>}, {pipeline_mode = #tpu.pipeline_mode<synchronous>, transform_indices = @transform_5, window_bounds = array<i64: 128, 128>}, {pipeline_mode = #tpu.pipeline_mode<synchronous>, transform_indices = @transform_6, window_bounds = array<i64: 1, 128>}, {transform_indices = @transform_7, window_bounds = array<i64: 16, 128>}]} {
    %c0 = arith.constant 0 : index
    %c0_0 = arith.constant 0 : index
    %0 = vector.load %arg1[%c0, %c0_0] : memref<16x128xbf16, #tpu.memory_space<vmem>>, vector<16x128xbf16>
    %c0_1 = arith.constant 0 : index
    %c0_2 = arith.constant 0 : index
    %1 = vector.load %arg2[%c0_1, %c0_2] : memref<128x128xbf16, #tpu.memory_space<vmem>>, vector<128x128xbf16>
    %cst = arith.constant dense<0.000000e+00> : vector<16x128xf32>
    %2 = tpu.matmul %0, %1, %cst {dimension_numbers = #tpu.dot_dimension_numbers<[1], [0], [0], [1], [0, 0, 1, 1], [], []>} : vector<16x128xbf16>, vector<128x128xbf16>, vector<16x128xf32> -> vector<16x128xf32>
    %c0_3 = arith.constant 0 : index
    %c0_4 = arith.constant 0 : index
    %3 = vector.load %arg3[%c0_3, %c0_4] : memref<1x128xf32, #tpu.memory_space<vmem>>, vector<1x128xf32>
    %4 = vector.broadcast %3 : vector<1x128xf32> to vector<16x128xf32>
    %5 = arith.addf %2, %4 : vector<16x128xf32>
    %cst_5 = arith.constant 0.000000e+00 : f32
    %6 = vector.broadcast %cst_5 : f32 to vector<16x128xf32>
    %7 = arith.maximumf %5, %6 : vector<16x128xf32>
    %8 = arith.truncf %7 : vector<16x128xf32> to vector<16x128xbf16>
    %c0_6 = arith.constant 0 : index
    %c0_7 = arith.constant 0 : index
    %9 = vector.load %arg4[%c0_6, %c0_7] : memref<128x128xbf16, #tpu.memory_space<vmem>>, vector<128x128xbf16>
    %cst_8 = arith.constant dense<0.000000e+00> : vector<16x128xf32>
    %10 = tpu.matmul %8, %9, %cst_8 {dimension_numbers = #tpu.dot_dimension_numbers<[1], [0], [0], [1], [0, 0, 1, 1], [], []>} : vector<16x128xbf16>, vector<128x128xbf16>, vector<16x128xf32> -> vector<16x128xf32>
    %c0_9 = arith.constant 0 : index
    %c0_10 = arith.constant 0 : index
    %11 = vector.load %arg5[%c0_9, %c0_10] : memref<1x128xf32, #tpu.memory_space<vmem>>, vector<1x128xf32>
    %12 = vector.broadcast %11 : vector<1x128xf32> to vector<16x128xf32>
    %13 = arith.addf %10, %12 : vector<16x128xf32>
    %cst_11 = arith.constant 0.000000e+00 : f32
    %14 = vector.broadcast %cst_11 : f32 to vector<16x128xf32>
    %15 = arith.maximumf %13, %14 : vector<16x128xf32>
    %16 = arith.truncf %15 : vector<16x128xf32> to vector<16x128xbf16>
    %c0_12 = arith.constant 0 : index
    %c0_13 = arith.constant 0 : index
    %17 = vector.load %arg6[%c0_12, %c0_13] : memref<128x128xbf16, #tpu.memory_space<vmem>>, vector<128x128xbf16>
    %cst_14 = arith.constant dense<0.000000e+00> : vector<16x128xf32>
    %18 = tpu.matmul %16, %17, %cst_14 {dimension_numbers = #tpu.dot_dimension_numbers<[1], [0], [0], [1], [0, 0, 1, 1], [], []>} : vector<16x128xbf16>, vector<128x128xbf16>, vector<16x128xf32> -> vector<16x128xf32>
    %c0_15 = arith.constant 0 : index
    %c0_16 = arith.constant 0 : index
    %19 = vector.load %arg7[%c0_15, %c0_16] : memref<1x128xf32, #tpu.memory_space<vmem>>, vector<1x128xf32>
    %20 = vector.broadcast %19 : vector<1x128xf32> to vector<16x128xf32>
    %21 = arith.addf %18, %20 : vector<16x128xf32>
    %c0_17 = arith.constant 0 : index
    %c0_18 = arith.constant 0 : index
    %22 = vector.load %arg8[%c0_17, %c0_18] : memref<16x128xf32, #tpu.memory_space<vmem>>, vector<16x128xf32>
    tpu.vector_store %arg8[%c0_17, %c0_18], %21 {strides = array<i32>} : memref<16x128xf32, #tpu.memory_space<vmem>>, vector<16x128xf32>,
    return
  }
  func.func @transform_0(%arg0: i32) -> (i32, i32) {
    %c0_i32 = arith.constant 0 : i32
    %c0_i32_0 = arith.constant 0 : i32
    return %arg0, %c0_i32 : i32, i32
  }
  func.func @transform_1(%arg0: i32) -> (i32, i32) {
    %c0_i32 = arith.constant 0 : i32
    %c0_i32_0 = arith.constant 0 : i32
    %c0_i32_1 = arith.constant 0 : i32
    return %c0_i32, %c0_i32_0 : i32, i32
  }
  func.func @transform_2(%arg0: i32) -> (i32, i32) {
    %c0_i32 = arith.constant 0 : i32
    %c0_i32_0 = arith.constant 0 : i32
    %c0_i32_1 = arith.constant 0 : i32
    return %c0_i32, %c0_i32_0 : i32, i32
  }
  func.func @transform_3(%arg0: i32) -> (i32, i32) {
    %c0_i32 = arith.constant 0 : i32
    %c0_i32_0 = arith.constant 0 : i32
    %c0_i32_1 = arith.constant 0 : i32
    return %c0_i32, %c0_i32_0 : i32, i32
  }
  func.func @transform_4(%arg0: i32) -> (i32, i32) {
    %c0_i32 = arith.constant 0 : i32
    %c0_i32_0 = arith.constant 0 : i32
    %c0_i32_1 = arith.constant 0 : i32
    return %c0_i32, %c0_i32_0 : i32, i32
  }
  func.func @transform_5(%arg0: i32) -> (i32, i32) {
    %c0_i32 = arith.constant 0 : i32
    %c0_i32_0 = arith.constant 0 : i32
    %c0_i32_1 = arith.constant 0 : i32
    return %c0_i32, %c0_i32_0 : i32, i32
  }
  func.func @transform_6(%arg0: i32) -> (i32, i32) {
    %c0_i32 = arith.constant 0 : i32
    %c0_i32_0 = arith.constant 0 : i32
    %c0_i32_1 = arith.constant 0 : i32
    return %c0_i32, %c0_i32_0 : i32, i32
  }
  func.func @transform_7(%arg0: i32) -> (i32, i32) {
    %c0_i32 = arith.constant 0 : i32
    %c0_i32_0 = arith.constant 0 : i32
    return %arg0, %c0_i32 : i32, i32
  }
}

</mosaic_0001>

<llo_original>
// kernel: tpu_custom_call.1
$region0: #{tpu_custom_call.1}
  #allocation0 [shape = 'u32[]', space=smem, size = 0x4, offset = 0x4, fixed_abs, tag = 'smem constant byte address 0x4 - core index']
  #allocation1 [shape = 'u32[144,128]{1,0:T(1,128)}', space=vmem, size = 0x12000, scoped, tag = 'internal scratch']
  %s0 = inlined_call_operand.hbm [shape: bf16[16,128], index: 0, kind: input, shape index: {}]
  %s1 = inlined_call_operand.hbm [shape: bf16[128,128], index: 1, kind: input, shape index: {}]
  %s2 = inlined_call_operand.vmem [shape: f32[1,128], index: 2, kind: input, shape index: {}]
  %s3 = inlined_call_operand.hbm [shape: bf16[128,128], index: 3, kind: input, shape index: {}]
  %s4 = inlined_call_operand.vmem [shape: f32[1,128], index: 4, kind: input, shape index: {}]
  %s5 = inlined_call_operand.hbm [shape: bf16[128,128], index: 5, kind: input, shape index: {}]
  %s6 = inlined_call_operand.vmem [shape: f32[1,128], index: 6, kind: input, shape index: {}]
  %s7 = inlined_call_operand.hbm [shape: f32[16,128], index: 7, kind: output, shape index: {}]
  %s8 = sld [smem:[#allocation0]]
  $region54: #{tpu_custom_call.1} parent=0
    _
  %s10 = ssub.s32 1, %s8
  %s11 = scalar_select 0, %s10, %s8
  $region1: #{tpu_custom_call.1} parent=0
    #allocation2 [shape = 'u8[4096]{0}', space=vmem, size = 0x1000, scoped, tag = 'input window, operand 0, single buffered']
    #allocation3 [shape = 's32[1]{0}', space=sflag, size = 0x4, scoped, tag = 'scoped memory for tpu_custom_call.1']
    #allocation4 [shape = 's32[1]{0}', space=sflag, size = 0x4, scoped, tag = 'scoped memory for tpu_custom_call.1']
    #allocation5 [shape = 'u8[32768]{0}', space=vmem, size = 0x8000, scoped, tag = 'input window, operand 1, single buffered']
    #allocation6 [shape = 's32[1]{0}', space=sflag, size = 0x4, scoped, tag = 'scoped memory for tpu_custom_call.1']
    #allocation7 [shape = 'u8[32768]{0}', space=vmem, size = 0x8000, scoped, tag = 'input window, operand 3, single buffered']
    #allocation8 [shape = 'u8[32768]{0}', space=vmem, size = 0x8000, scoped, tag = 'input window, operand 5, single buffered']
    #allocation9 [shape = 's32[1]{0}', space=sflag, size = 0x4, scoped, tag = 'scoped memory for tpu_custom_call.1']
    #allocation10 [shape = 'u8[8192]{0}', space=vmem, size = 0x2000, scoped, tag = 'output window, operand 0, single buffered']
    %12 = vsyncpa [#allocation3], 0
    %13 = vsyncpa [#allocation6], 0
    %14 = vsyncpa [#allocation9], 0
    %15 = vsyncpa [#allocation4], 0
    // Predicated region
    $region2: #{tpu_custom_call.1} parent=1 // pred_check
      _
    $region3: #{tpu_custom_call.1} parent=1 // pred_check_branch
      %17 = sbr.rel (0) target = $region5
    $region4: #{tpu_custom_call.1} parent=1 // pred_region
      %s19 = ssub.s32 128, 128
      %20 = vsyncadd [#allocation3], %s19
      %s21 = sshll.u32 [#allocation2], 4
      %s22 = int_to_ptr.vmem [resolvable:$true] %s21
      %27 = dma.hbm_to_vmem [thread:$0]  %s0, 128, %s22, [#allocation3], 64, 64, 4
    $region5: #{tpu_custom_call.1} parent=1 // pred_fallthru
      _
    // Predicated region
    $region6: #{tpu_custom_call.1} parent=1 // pred_check
      _
    $region7: #{tpu_custom_call.1} parent=1 // pred_check_branch
      %29 = sbr.rel (0) target = $region9
    $region8: #{tpu_custom_call.1} parent=1 // pred_region
      %s31 = ssub.s32 1024, 1024
      %32 = vsyncadd [#allocation6], %s31
      %s33 = sshll.u32 [#allocation5], 4
      %s34 = int_to_ptr.vmem [resolvable:$true] %s33
      %39 = dma.hbm_to_vmem [thread:$0]  %s1, 1024, %s34, [#allocation6], 64, 64, 4
    $region9: #{tpu_custom_call.1} parent=1 // pred_fallthru
      _
    // Predicated region
    $region10: #{tpu_custom_call.1} parent=1 // pred_check
      _
    $region11: #{tpu_custom_call.1} parent=1 // pred_check_branch
      %41 = sbr.rel (0) target = $region13
    $region12: #{tpu_custom_call.1} parent=1 // pred_region
      _
    $region13: #{tpu_custom_call.1} parent=1 // pred_fallthru
      _
    // Predicated region
    $region14: #{tpu_custom_call.1} parent=1 // pred_check
      _
    $region15: #{tpu_custom_call.1} parent=1 // pred_check_branch
      %43 = sbr.rel (0) target = $region17
    $region16: #{tpu_custom_call.1} parent=1 // pred_region
      %s45 = ssub.s32 1024, 1024
      %46 = vsyncadd [#allocation6], %s45
      %s47 = sshll.u32 [#allocation7], 4
      %s48 = int_to_ptr.vmem [resolvable:$true] %s47
      %53 = dma.hbm_to_vmem [thread:$0]  %s3, 1024, %s48, [#allocation6], 64, 64, 4
    $region17: #{tpu_custom_call.1} parent=1 // pred_fallthru
      _
    // Predicated region
    $region18: #{tpu_custom_call.1} parent=1 // pred_check
      _
    $region19: #{tpu_custom_call.1} parent=1 // pred_check_branch
      %55 = sbr.rel (0) target = $region21
    $region20: #{tpu_custom_call.1} parent=1 // pred_region
      _
    $region21: #{tpu_custom_call.1} parent=1 // pred_fallthru
      _
    // Predicated region
    $region22: #{tpu_custom_call.1} parent=1 // pred_check
      _
    $region23: #{tpu_custom_call.1} parent=1 // pred_check_branch
      %57 = sbr.rel (0) target = $region25
    $region24: #{tpu_custom_call.1} parent=1 // pred_region
      %s59 = ssub.s32 1024, 1024
      %60 = vsyncadd [#allocation9], %s59
      %s61 = sshll.u32 [#allocation8], 4
      %s62 = int_to_ptr.vmem [resolvable:$true] %s61
      %67 = dma.hbm_to_vmem [thread:$0]  %s5, 1024, %s62, [#allocation9], 64, 64, 4
    $region25: #{tpu_custom_call.1} parent=1 // pred_fallthru
      _
    // Predicated region
    $region26: #{tpu_custom_call.1} parent=1 // pred_check
      _
    $region27: #{tpu_custom_call.1} parent=1 // pred_check_branch
      %69 = sbr.rel (0) target = $region29
    $region28: #{tpu_custom_call.1} parent=1 // pred_region
      _
    $region29: #{tpu_custom_call.1} parent=1 // pred_fallthru
      _
    // Predicated region
    $region30: #{tpu_custom_call.1} parent=1 // pred_check
      _
    $region31: #{tpu_custom_call.1} parent=1 // pred_check_branch
      %71 = sbr.rel (0) target = $region33
    $region32: #{tpu_custom_call.1} parent=1 // pred_region
      %72 = dma.done [#allocation3], 128
    $region33: #{tpu_custom_call.1} parent=1 // pred_fallthru
      _
    // Predicated region
    $region34: #{tpu_custom_call.1} parent=1 // pred_check
      _
    $region35: #{tpu_custom_call.1} parent=1 // pred_check_branch
      %74 = sbr.rel (0) target = $region37
    $region36: #{tpu_custom_call.1} parent=1 // pred_region
      %75 = dma.done [#allocation6], 1024
    $region37: #{tpu_custom_call.1} parent=1 // pred_fallthru
      _
    // Predicated region
    $region38: #{tpu_custom_call.1} parent=1 // pred_check
      _
    $region39: #{tpu_custom_call.1} parent=1 // pred_check_branch
      %77 = sbr.rel (0) target = $region41
    $region40: #{tpu_custom_call.1} parent=1 // pred_region
      %78 = dma.done [#allocation6], 1024
    $region41: #{tpu_custom_call.1} parent=1 // pred_fallthru
      _
    // Predicated region
    $region42: #{tpu_custom_call.1} parent=1 // pred_check
      _
    $region43: #{tpu_custom_call.1} parent=1 // pred_check_branch
      %80 = sbr.rel (0) target = $region45
    $region44: #{tpu_custom_call.1} parent=1 // pred_region
      %81 = dma.done [#allocation9], 1024
    $region45: #{tpu_custom_call.1} parent=1 // pred_fallthru
      _
    %v83 = vld [vmem:[#allocation2] sm:$0xf]
    %v84 = vld [vmem:[#allocation2 + $0x4] sm:$0xf]
    %v85 = vld [vmem:[#allocation5] sm:$0xf]
    %v86 = vld [vmem:[#allocation5 + $0x4] sm:$0xf]
    %v87 = vld [vmem:[#allocation5 + $0x8] sm:$0xf]
    %v88 = vld [vmem:[#allocation5 + $0xc] sm:$0xf]
    %v89 = vld [vmem:[#allocation5 + $0x10] sm:$0xf]
    %v90 = vld [vmem:[#allocation5 + $0x14] sm:$0xf]
    %v91 = vld [vmem:[#allocation5 + $0x18] sm:$0xf]
    %v92 = vld [vmem:[#allocation5 + $0x1c] sm:$0xf]
    %v93 = vld [vmem:[#allocation5 + $0x20] sm:$0xf]
    %v94 = vld [vmem:[#allocation5 + $0x24] sm:$0xf]
    %v95 = vld [vmem:[#allocation5 + $0x28] sm:$0xf]
    %v96 = vld [vmem:[#allocation5 + $0x2c] sm:$0xf]
    %v97 = vld [vmem:[#allocation5 + $0x30] sm:$0xf]
    %v98 = vld [vmem:[#allocation5 + $0x34] sm:$0xf]
    %v99 = vld [vmem:[#allocation5 + $0x38] sm:$0xf]
    %v100 = vld [vmem:[#allocation5 + $0x3c] sm:$0xf]
    %v101 = vld [vmem:[%s2] sm:$0x1]
    %v103 = vlaneseq
    %v104 = vshrl.u32 %v103, 7
    %v105 = vsub.s32 0, %v104
    %v106 = vrot.slane %v101, %v105
    %v110 = vunpack.c.l.b16 %v83
    %v111 = vunpack.c.l.b16 %v84
    %v112 = vpack.c.b16 %v111, %v110
    %v130 = vunpack.c.l.b16 %v85
    %v131 = vunpack.c.l.b16 %v86
    %v132 = vunpack.c.l.b16 %v87
    %v133 = vunpack.c.l.b16 %v88
    %v134 = vunpack.c.l.b16 %v89
    %v135 = vunpack.c.l.b16 %v90
    %v136 = vunpack.c.l.b16 %v91
    %v137 = vunpack.c.l.b16 %v92
    %v138 = vunpack.c.l.b16 %v93
    %v139 = vunpack.c.l.b16 %v94
    %v140 = vunpack.c.l.b16 %v95
    %v141 = vunpack.c.l.b16 %v96
    %v142 = vunpack.c.l.b16 %v97
    %v143 = vunpack.c.l.b16 %v98
    %v144 = vunpack.c.l.b16 %v99
    %v145 = vunpack.c.l.b16 %v100
    %v146 = vpack.c.b16 %v131, %v130
    %v147 = vpack.c.b16 %v133, %v132
    %v148 = vpack.c.b16 %v135, %v134
    %v149 = vpack.c.b16 %v137, %v136
    %v150 = vpack.c.b16 %v139, %v138
    %v151 = vpack.c.b16 %v141, %v140
    %v152 = vpack.c.b16 %v143, %v142
    %v153 = vpack.c.b16 %v145, %v144
    %162 = vmatprep.subr.bf16.mxu0 0
    %163 = vmatpush1.bf16.msra.mxu0 %v153
    %164 = vmatprep.subr.bf16.mxu0 0
    %165 = vmatpush1.bf16.msra.mxu0 %v152
    %166 = vmatprep.subr.bf16.mxu0 0
    %167 = vmatpush1.bf16.msra.mxu0 %v151
    %168 = vmatprep.subr.bf16.mxu0 0
    %169 = vmatpush1.bf16.msra.mxu0 %v150
    %170 = vmatprep.subr.bf16.mxu0 0
    %171 = vmatpush1.bf16.msra.mxu0 %v149
    %172 = vmatprep.subr.bf16.mxu0 0
    %173 = vmatpush1.bf16.msra.mxu0 %v148
    %174 = vmatprep.subr.bf16.mxu0 0
    %175 = vmatpush1.bf16.msra.mxu0 %v147
    %176 = vmatprep.subr.bf16.mxu0 0
    %177 = vmatpush1.bf16.msra.mxu0 %v146
    %178 = vmatprep.subr.bf16.mxu0 0
    %179 = vmatpush2.bf16.msra.mxu0 0
    %180 = vmatprep.subr.bf16.mxu0 0
    %181 = vmatpush2.bf16.msra.mxu0 0
    %182 = vmatprep.subr.bf16.mxu0 0
    %183 = vmatpush2.bf16.msra.mxu0 0
    %184 = vmatprep.subr.bf16.mxu0 0
    %185 = vmatpush2.bf16.msra.mxu0 0
    %186 = vmatprep.subr.bf16.mxu0 0
    %187 = vmatpush2.bf16.msra.mxu0 0
    %188 = vmatprep.subr.bf16.mxu0 0
    %189 = vmatpush2.bf16.msra.mxu0 0
    %190 = vmatprep.subr.bf16.mxu0 0
    %191 = vmatpush2.bf16.msra.mxu0 0
    %192 = vmatprep.subr.bf16.mxu0 0
    %193 = vmatpush2.bf16.msra.mxu0 0
    %194 = vmatprep.mubr.bf16.mxu0 0
    %195 = vmatmul.mubr.bf16.gmra.mxu0 %v112
    %v196 = vpop.f32.mrf.mxu0
    %v197 = vadd.f32 %v106, %v196
    %v198 = vpop.f32.mrf.mxu0
    %v199 = vpop.f32.mrf.mxu0
    %v200 = vadd.f32 %v106, %v199
    %v201 = vpop.f32.mrf.mxu0
    %202 = vdwg.mxu0
    %v203 = vmax.f32 %v197, 0.0
    %v204 = vmax.f32 %v200, 0.0
    %v205 = vpack.c.bf16 %v204, %v203
    %v206 = vld [vmem:[#allocation7] sm:$0xf]
    %v207 = vld [vmem:[#allocation7 + $0x4] sm:$0xf]
    %v208 = vld [vmem:[#allocation7 + $0x8] sm:$0xf]
    %v209 = vld [vmem:[#allocation7 + $0xc] sm:$0xf]
    %v210 = vld [vmem:[#allocation7 + $0x10] sm:$0xf]
    %v211 = vld [vmem:[#allocation7 + $0x14] sm:$0xf]
    %v212 = vld [vmem:[#allocation7 + $0x18] sm:$0xf]
    %v213 = vld [vmem:[#allocation7 + $0x1c] sm:$0xf]
    %v214 = vld [vmem:[#allocation7 + $0x20] sm:$0xf]
    %v215 = vld [vmem:[#allocation7 + $0x24] sm:$0xf]
    %v216 = vld [vmem:[#allocation7 + $0x28] sm:$0xf]
    %v217 = vld [vmem:[#allocation7 + $0x2c] sm:$0xf]
    %v218 = vld [vmem:[#allocation7 + $0x30] sm:$0xf]
    %v219 = vld [vmem:[#allocation7 + $0x34] sm:$0xf]
    %v220 = vld [vmem:[#allocation7 + $0x38] sm:$0xf]
    %v221 = vld [vmem:[#allocation7 + $0x3c] sm:$0xf]
    %v222 = vld [vmem:[%s4] sm:$0x1]
    %v224 = vlaneseq
    %v225 = vshrl.u32 %v224, 7
    %v226 = vsub.s32 0, %v225
    %v227 = vrot.slane %v222, %v226
    %v245 = vunpack.c.l.b16 %v206
    %v246 = vunpack.c.l.b16 %v207
    %v247 = vunpack.c.l.b16 %v208
    %v248 = vunpack.c.l.b16 %v209
    %v249 = vunpack.c.l.b16 %v210
    %v250 = vunpack.c.l.b16 %v211
    %v251 = vunpack.c.l.b16 %v212
    %v252 = vunpack.c.l.b16 %v213
    %v253 = vunpack.c.l.b16 %v214
    %v254 = vunpack.c.l.b16 %v215
    %v255 = vunpack.c.l.b16 %v216
    %v256 = vunpack.c.l.b16 %v217
    %v257 = vunpack.c.l.b16 %v218
    %v258 = vunpack.c.l.b16 %v219
    %v259 = vunpack.c.l.b16 %v220
    %v260 = vunpack.c.l.b16 %v221
    %v261 = vpack.c.b16 %v246, %v245
    %v262 = vpack.c.b16 %v248, %v247
    %v263 = vpack.c.b16 %v250, %v249
    %v264 = vpack.c.b16 %v252, %v251
    %v265 = vpack.c.b16 %v254, %v253
    %v266 = vpack.c.b16 %v256, %v255
    %v267 = vpack.c.b16 %v258, %v257
    %v268 = vpack.c.b16 %v260, %v259
    %277 = vmatprep.subr.bf16.mxu0 0
    %278 = vmatpush1.bf16.msra.mxu0 %v268
    %279 = vmatprep.subr.bf16.mxu0 0
    %280 = vmatpush1.bf16.msra.mxu0 %v267
    %281 = vmatprep.subr.bf16.mxu0 0
    %282 = vmatpush1.bf16.msra.mxu0 %v266
    %283 = vmatprep.subr.bf16.mxu0 0
    %284 = vmatpush1.bf16.msra.mxu0 %v265
    %285 = vmatprep.subr.bf16.mxu0 0
    %286 = vmatpush1.bf16.msra.mxu0 %v264
    %287 = vmatprep.subr.bf16.mxu0 0
    %288 = vmatpush1.bf16.msra.mxu0 %v263
    %289 = vmatprep.subr.bf16.mxu0 0
    %290 = vmatpush1.bf16.msra.mxu0 %v262
    %291 = vmatprep.subr.bf16.mxu0 0
    %292 = vmatpush1.bf16.msra.mxu0 %v261
    %293 = vmatprep.subr.bf16.mxu0 0
    %294 = vmatpush2.bf16.msra.mxu0 0
    %295 = vmatprep.subr.bf16.mxu0 0
    %296 = vmatpush2.bf16.msra.mxu0 0
    %297 = vmatprep.subr.bf16.mxu0 0
    %298 = vmatpush2.bf16.msra.mxu0 0
    %299 = vmatprep.subr.bf16.mxu0 0
    %300 = vmatpush2.bf16.msra.mxu0 0
    %301 = vmatprep.subr.bf16.mxu0 0
    %302 = vmatpush2.bf16.msra.mxu0 0
    %303 = vmatprep.subr.bf16.mxu0 0
    %304 = vmatpush2.bf16.msra.mxu0 0
    %305 = vmatprep.subr.bf16.mxu0 0
    %306 = vmatpush2.bf16.msra.mxu0 0
    %307 = vmatprep.subr.bf16.mxu0 0
    %308 = vmatpush2.bf16.msra.mxu0 0
    %309 = vmatprep.mubr.bf16.mxu0 0
    %310 = vmatmul.mubr.bf16.gmra.mxu0 %v205
    %v311 = vpop.f32.mrf.mxu0
    %v312 = vadd.f32 %v227, %v311
    %v313 = vpop.f32.mrf.mxu0
    %v314 = vpop.f32.mrf.mxu0
    %v315 = vadd.f32 %v227, %v314
    %v316 = vpop.f32.mrf.mxu0
    %317 = vdwg.mxu0
    %v318 = vmax.f32 %v312, 0.0
    %v319 = vmax.f32 %v315, 0.0
    %v320 = vpack.c.bf16 %v319, %v318
    %v321 = vld [vmem:[#allocation8] sm:$0xf]
    %v322 = vld [vmem:[#allocation8 + $0x4] sm:$0xf]
    %v323 = vld [vmem:[#allocation8 + $0x8] sm:$0xf]
    %v324 = vld [vmem:[#allocation8 + $0xc] sm:$0xf]
    %v325 = vld [vmem:[#allocation8 + $0x10] sm:$0xf]
    %v326 = vld [vmem:[#allocation8 + $0x14] sm:$0xf]
    %v327 = vld [vmem:[#allocation8 + $0x18] sm:$0xf]
    %v328 = vld [vmem:[#allocation8 + $0x1c] sm:$0xf]
    %v329 = vld [vmem:[#allocation8 + $0x20] sm:$0xf]
    %v330 = vld [vmem:[#allocation8 + $0x24] sm:$0xf]
    %v331 = vld [vmem:[#allocation8 + $0x28] sm:$0xf]
    %v332 = vld [vmem:[#allocation8 + $0x2c] sm:$0xf]
    %v333 = vld [vmem:[#allocation8 + $0x30] sm:$0xf]
    %v334 = vld [vmem:[#allocation8 + $0x34] sm:$0xf]
    %v335 = vld [vmem:[#allocation8 + $0x38] sm:$0xf]
    %v336 = vld [vmem:[#allocation8 + $0x3c] sm:$0xf]
    %v337 = vld [vmem:[%s6] sm:$0x1]
    %v339 = vlaneseq
    %v340 = vshrl.u32 %v339, 7
    %v341 = vsub.s32 0, %v340
    %v342 = vrot.slane %v337, %v341
    %v360 = vunpack.c.l.b16 %v321
    %v361 = vunpack.c.l.b16 %v322
    %v362 = vunpack.c.l.b16 %v323
    %v363 = vunpack.c.l.b16 %v324
    %v364 = vunpack.c.l.b16 %v325
    %v365 = vunpack.c.l.b16 %v326
    %v366 = vunpack.c.l.b16 %v327
    %v367 = vunpack.c.l.b16 %v328
    %v368 = vunpack.c.l.b16 %v329
    %v369 = vunpack.c.l.b16 %v330
    %v370 = vunpack.c.l.b16 %v331
    %v371 = vunpack.c.l.b16 %v332
    %v372 = vunpack.c.l.b16 %v333
    %v373 = vunpack.c.l.b16 %v334
    %v374 = vunpack.c.l.b16 %v335
    %v375 = vunpack.c.l.b16 %v336
    %v376 = vpack.c.b16 %v361, %v360
    %v377 = vpack.c.b16 %v363, %v362
    %v378 = vpack.c.b16 %v365, %v364
    %v379 = vpack.c.b16 %v367, %v366
    %v380 = vpack.c.b16 %v369, %v368
    %v381 = vpack.c.b16 %v371, %v370
    %v382 = vpack.c.b16 %v373, %v372
    %v383 = vpack.c.b16 %v375, %v374
    %392 = vmatprep.subr.bf16.mxu0 0
    %393 = vmatpush1.bf16.msra.mxu0 %v383
    %394 = vmatprep.subr.bf16.mxu0 0
    %395 = vmatpush1.bf16.msra.mxu0 %v382
    %396 = vmatprep.subr.bf16.mxu0 0
    %397 = vmatpush1.bf16.msra.mxu0 %v381
    %398 = vmatprep.subr.bf16.mxu0 0
    %399 = vmatpush1.bf16.msra.mxu0 %v380
    %400 = vmatprep.subr.bf16.mxu0 0
    %401 = vmatpush1.bf16.msra.mxu0 %v379
    %402 = vmatprep.subr.bf16.mxu0 0
    %403 = vmatpush1.bf16.msra.mxu0 %v378
    %404 = vmatprep.subr.bf16.mxu0 0
    %405 = vmatpush1.bf16.msra.mxu0 %v377
    %406 = vmatprep.subr.bf16.mxu0 0
    %407 = vmatpush1.bf16.msra.mxu0 %v376
    %408 = vmatprep.subr.bf16.mxu0 0
    %409 = vmatpush2.bf16.msra.mxu0 0
    %410 = vmatprep.subr.bf16.mxu0 0
    %411 = vmatpush2.bf16.msra.mxu0 0
    %412 = vmatprep.subr.bf16.mxu0 0
    %413 = vmatpush2.bf16.msra.mxu0 0
    %414 = vmatprep.subr.bf16.mxu0 0
    %415 = vmatpush2.bf16.msra.mxu0 0
    %416 = vmatprep.subr.bf16.mxu0 0
    %417 = vmatpush2.bf16.msra.mxu0 0
    %418 = vmatprep.subr.bf16.mxu0 0
    %419 = vmatpush2.bf16.msra.mxu0 0
    %420 = vmatprep.subr.bf16.mxu0 0
    %421 = vmatpush2.bf16.msra.mxu0 0
    %422 = vmatprep.subr.bf16.mxu0 0
    %423 = vmatpush2.bf16.msra.mxu0 0
    %424 = vmatprep.mubr.bf16.mxu0 0
    %425 = vmatmul.mubr.bf16.gmra.mxu0 %v320
    %v426 = vpop.f32.mrf.mxu0
    %v427 = vadd.f32 %v342, %v426
    %v428 = vpop.f32.mrf.mxu0
    %v429 = vpop.f32.mrf.mxu0
    %v430 = vadd.f32 %v342, %v429
    %v431 = vpop.f32.mrf.mxu0
    %432 = vdwg.mxu0
    %433 = vst [vmem:[#allocation10] sm:$0xff] %v427
    %434 = vst [vmem:[#allocation10 + $0x8] sm:$0xff] %v430
    // Predicated region
    $region46: #{tpu_custom_call.1} parent=1 // pred_check
      _
    $region47: #{tpu_custom_call.1} parent=1 // pred_check_branch
      %436 = sbr.rel (0) target = $region49
    $region48: #{tpu_custom_call.1} parent=1 // pred_region
      %s438 = ssub.s32 256, 256
      %439 = vsyncadd [#allocation4], %s438
      %s440 = sshll.u32 [#allocation10], 4
      %s441 = int_to_ptr.vmem [resolvable:$true] %s440
      %446 = dma.vmem_to_hbm [thread:$0]  %s441, 256, %s7, [#allocation4], 128, 128, 8
    $region49: #{tpu_custom_call.1} parent=1 // pred_fallthru
      _
    // Predicated region
    $region50: #{tpu_custom_call.1} parent=1 // pred_check
      _
    $region51: #{tpu_custom_call.1} parent=1 // pred_check_branch
      %448 = sbr.rel (0) target = $region53
    $region52: #{tpu_custom_call.1} parent=1 // pred_region
      %449 = dma.done [#allocation4], 256
    $region53: #{tpu_custom_call.1} parent=1 // pred_fallthru
      _
    %450 = vsyncpa [#allocation3], 1
    %451 = vsyncpa [#allocation6], 1
    %452 = vsyncpa [#allocation9], 1
    %453 = vsyncpa [#allocation4], 1

</llo_original>
